<compile_context>
chip_gen: v7x
topology: tpu7x:2x2x1
jax: 0.10.0
libtpu: 0.0.40
codegen_flags: <defaults>
</compile_context>

<pallas_src>
import functools
from typing import NamedTuple

import jax
import jax.numpy as jnp
from jax.experimental import pallas as pl
from jax.experimental.pallas import tpu as pltpu


class Mixture(NamedTuple):
    positions: jnp.ndarray  # (B, C, K, D)
    weights: jnp.ndarray    # (B, C, K, W)


_EPS = 1e-5


# ----------------------------------------------------------------------------
# Kernels
# ----------------------------------------------------------------------------

def _fused_norm_kernel(x_ref, gamma_ref, beta_ref, o_ref, *, inv_n, n_weights, kw):
    # x_ref: (B, ct, KW) lane-dense.  gamma/beta: (ct, KW) f32, pre-tiled over k.
    x = x_ref[...].astype(jnp.float32)
    s = jnp.sum(x, axis=0)                       # (ct, KW) partial over batch
    ss = jnp.sum(x * x, axis=0)
    # Finish the reduction over k (it lives inside the lane axis as k*W + w) and
    # broadcast it back across k with one tiny MXU matmul against the "same-w"
    # indicator matrix M[i, j] = (i % W == j % W).
    row = jax.lax.broadcasted_iota(jnp.int32, (kw, kw), 0) % n_weights
    col = jax.lax.broadcasted_iota(jnp.int32, (kw, kw), 1) % n_weights
    m = (row == col).astype(jnp.float32)
    mean = jnp.dot(s, m, preferred_element_type=jnp.float32) * inv_n   # (ct, KW)
    esq = jnp.dot(ss, m, preferred_element_type=jnp.float32) * inv_n
    var = jnp.maximum(esq - mean * mean, 0.0)    # biased variance (training mode)
    inv = jax.lax.rsqrt(var + _EPS)              # EUP slot, hidden under DMA
    scale = gamma_ref[...] * inv
    shift = beta_ref[...] - mean * scale
    o_ref[...] = (x * scale[None] + shift[None]).astype(o_ref.dtype)


def _stats_kernel(x_ref, sum_ref, ssq_ref):
    # Lane-dense per-(c, k, w) partial sums reduced over B only; the K-reduction
    # is finished on the tiny (C, K*W) outputs in plain JAX.
    @pl.when(pl.program_id(1) == 0)
    def _():
        sum_ref[...] = jnp.zeros_like(sum_ref)
        ssq_ref[...] = jnp.zeros_like(ssq_ref)

    x = x_ref[...].astype(jnp.float32)           # (bt, ct, KW)
    sum_ref[...] += jnp.sum(x, axis=0)
    ssq_ref[...] += jnp.sum(x * x, axis=0)


def _affine_kernel(x_ref, scale_ref, shift_ref, o_ref):
    # Elementwise y = x * scale + shift with lane-dense per-(c, k*W + w) params.
    x = x_ref[...].astype(jnp.float32)
    o_ref[...] = (x * scale_ref[...][None] + shift_ref[...][None]).astype(o_ref.dtype)


# ----------------------------------------------------------------------------
# Tiling / budget helpers
# ----------------------------------------------------------------------------

def _ceil_to(x, m):
    return -(-x // m) * m


def _vmem_budget():
    cap = 64 * 1024 * 1024                         # conservative fallback
    try:
        cap = int(pltpu.get_tpu_info().vmem_capacity_bytes)
    except Exception:
        pass
    limit = (3 * cap) // 4                         # 96 MiB on v5e/v6e, 48 MiB on v7x
    prefer_even_steps = cap <= 64 * 1024 * 1024    # v7x: 2 TCs share the parallel axis
    return limit, prefer_even_steps


def _pipeline_bytes(rows, ct, kw, dtype_bytes, extra=0):
    """Estimated VMEM for one grid step of an (rows, ct, KW) block pipeline."""
    sub = 8 * 4 // dtype_bytes                     # sublane packing of the io dtype
    lane = _ceil_to(kw, 128)
    io_block = rows * _ceil_to(ct, sub) * lane * dtype_bytes
    f32_block = rows * _ceil_to(ct, 8) * lane * 4
    # in + out double buffers, ~3 f32-block in-kernel working set, extras (M matrix).
    return 4 * io_block + 3 * f32_block + extra


def _channel_tile_candidates(C):
    # Second-to-last block dim must be a multiple of 8 or the full extent.
    return [d for d in range(C, 0, -1) if C % d == 0 and (d == C or d % 8 == 0)]


# ----------------------------------------------------------------------------
# pallas_call wrappers
# ----------------------------------------------------------------------------

def _fused_call(w, gamma_ckw, beta_ckw, K, W, limit, prefer_even_steps):
    B, C, KW = w.shape
    dtype_bytes = w.dtype.itemsize
    m_bytes = _ceil_to(KW, 128) * _ceil_to(KW, 128) * 4
    budget = limit - 4 * 1024 * 1024               # headroom for Mosaic scratch/params
    cands = _channel_tile_candidates(C)
    fits = [d for d in cands
            if _pipeline_bytes(B, d, KW, dtype_bytes, extra=m_bytes) <= budget]
    if not fits:
        return None                                # fall back to the chunked path
    ct = fits[0]                                   # largest fitting channel tile
    if prefer_even_steps:                          # v7x: keep both TensorCores fed
        even = [d for d in fits if (C // d) % 2 == 0]
        if even:
            ct = even[0]

    cost = pl.CostEstimate(
        flops=7 * B * C * KW + 4 * C * KW * KW,
        transcendentals=C * KW,
        bytes_accessed=2 * B * C * KW * dtype_bytes + 2 * C * KW * 4)

    kernel = functools.partial(_fused_norm_kernel,
                               inv_n=1.0 / float(B * K), n_weights=W, kw=KW)
    return pl.pallas_call(
        kernel,
        out_shape=jax.ShapeDtypeStruct((B, C, KW), w.dtype),
        grid_spec=pltpu.PrefetchScalarGridSpec(
            num_scalar_prefetch=0,
            grid=(C // ct,),
            in_specs=[
                pl.BlockSpec((B, ct, KW), lambda i: (0, i, 0)),
                pl.BlockSpec((ct, KW), lambda i: (i, 0)),
                pl.BlockSpec((ct, KW), lambda i: (i, 0)),
            ],
            out_specs=pl.BlockSpec((B, ct, KW), lambda i: (0, i, 0)),
        ),
        compiler_params=pltpu.CompilerParams(
            dimension_semantics=("parallel",),
            vmem_limit_bytes=limit),
        cost_estimate=cost,
    )(w, gamma_ckw, beta_ckw)


def _chunked_call(w, gamma_cw, beta_cw, K, W, limit):
    B, C, KW = w.shape
    dtype_bytes = w.dtype.itemsize
    budget = limit - 4 * 1024 * 1024
    cands = _channel_tile_candidates(C)
    ct = next((d for d in cands if _pipeline_bytes(1, d, KW, dtype_bytes) <= budget),
              cands[-1])
    # TODO(synk): if even a (1, ct_min, K*W) slab exceeds the budget (K*W ~ 10^6+),
    # a third grid axis over K*W would be needed; not implemented.
    bt = next((d for d in range(B, 0, -1)
               if B % d == 0 and _pipeline_bytes(d, ct, KW, dtype_bytes) <= budget), 1)

    # Pass 1: lane-dense per-(c, k, w) sum / sum-of-squares accumulated over batch.
    stats_cost = pl.CostEstimate(
        flops=3 * B * C * KW, transcendentals=0,
        bytes_accessed=B * C * KW * dtype_bytes + 2 * C * KW * 4)
    s, ss = pl.pallas_call(
        _stats_kernel,
        out_shape=(jax.ShapeDtypeStruct((C, KW), jnp.float32),
                   jax.ShapeDtypeStruct((C, KW), jnp.float32)),
        grid_spec=pltpu.PrefetchScalarGridSpec(
            num_scalar_prefetch=0,
            grid=(C // ct, B // bt),
            in_specs=[pl.BlockSpec((bt, ct, KW), lambda i, j: (j, i, 0))],
            out_specs=(pl.BlockSpec((ct, KW), lambda i, j: (i, 0)),
                       pl.BlockSpec((ct, KW), lambda i, j: (i, 0))),
        ),
        compiler_params=pltpu.CompilerParams(
            dimension_semantics=("parallel", "arbitrary"),
            vmem_limit_bytes=limit),
        cost_estimate=stats_cost,
    )(w)

    # Tiny (C, K, W) f32 math stays in plain JAX: finish the K reduction and build
    # per-lane scale/shift broadcast back to the (c, k*W + w) lane layout.
    n = float(B * K)
    s_cw = jnp.sum(s.reshape(C, K, W), axis=1)
    ss_cw = jnp.sum(ss.reshape(C, K, W), axis=1)
    mean = s_cw / n
    var = jnp.maximum(ss_cw / n - mean * mean, 0.0)       # biased variance
    inv = jax.lax.rsqrt(var + _EPS)
    scale_cw = gamma_cw * inv
    shift_cw = beta_cw - mean * scale_cw
    scale = jnp.broadcast_to(scale_cw[:, None, :], (C, K, W)).reshape(C, KW)
    shift = jnp.broadcast_to(shift_cw[:, None, :], (C, K, W)).reshape(C, KW)

    # Pass 2: elementwise normalize + affine (lane-dense).
    affine_cost = pl.CostEstimate(
        flops=2 * B * C * KW, transcendentals=0,
        bytes_accessed=2 * B * C * KW * dtype_bytes + 2 * C * KW * 4)
    return pl.pallas_call(
        _affine_kernel,
        out_shape=jax.ShapeDtypeStruct((B, C, KW), w.dtype),
        grid_spec=pltpu.PrefetchScalarGridSpec(
            num_scalar_prefetch=0,
            grid=(C // ct, B // bt),
            in_specs=[
                pl.BlockSpec((bt, ct, KW), lambda i, j: (j, i, 0)),
                pl.BlockSpec((ct, KW), lambda i, j: (i, 0)),
                pl.BlockSpec((ct, KW), lambda i, j: (i, 0)),
            ],
            out_specs=pl.BlockSpec((bt, ct, KW), lambda i, j: (j, i, 0)),
        ),
        compiler_params=pltpu.CompilerParams(
            dimension_semantics=("parallel", "parallel"),
            vmem_limit_bytes=limit),
        cost_estimate=affine_cost,
    )(w, scale, shift)


def kernel_norm_forward(mix: Mixture, gamma: jnp.ndarray, beta: jnp.ndarray,
                        n_channels: int, n_weights: int, *,
                        force_chunked: bool = False) -> Mixture:
    B, C, K, W = mix.weights.shape
    assert C == n_channels, f"unexpected channels {C} != {n_channels}"
    assert W == n_weights, f"unexpected weights {W} != {n_weights}"
    assert gamma.size == C * W and beta.size == C * W

    KW = K * W
    # Lane-dense layout: K, W are the contiguous minor dims, so this reshape is free.
    w = mix.weights.reshape(B, C, KW)

    # BatchNorm1d feature index f = c * W + w; affine params kept in f32.
    gamma_cw = gamma.reshape(C, W).astype(jnp.float32)
    beta_cw = beta.reshape(C, W).astype(jnp.float32)

    limit, prefer_even_steps = _vmem_budget()

    y = None
    if not force_chunked:
        # gamma/beta tiled across k so the fused kernel applies them lane-dense.
        gamma_ckw = jnp.broadcast_to(gamma_cw[:, None, :], (C, K, W)).reshape(C, KW)
        beta_ckw = jnp.broadcast_to(beta_cw[:, None, :], (C, K, W)).reshape(C, KW)
        y = _fused_call(w, gamma_ckw, beta_ckw, K, W, limit, prefer_even_steps)
    if y is None:
        y = _chunked_call(w, gamma_cw, beta_cw, K, W, limit)

    # TODO(synk): nn.BatchNorm1d (training) also updates running_mean/running_var
    # with momentum; only the normalized output is produced here.
    return Mixture(mix.positions, y.reshape(B, C, K, W))


# ----------------------------------------------------------------------------
# Pure-JAX reference (mirrors nn.BatchNorm1d in training mode)
# ----------------------------------------------------------------------------

def _reference_forward(mix: Mixture, gamma, beta, C, W):
    B, _, K, _ = mix.weights.shape
    x = jnp.transpose(mix.weights, (0, 1, 3, 2)).reshape(B, C * W, K)
    mean = jnp.mean(x, axis=(0, 2), keepdims=True)
    var = jnp.mean((x - mean) ** 2, axis=(0, 2), keepdims=True)
    y = (x - mean) / jnp.sqrt(var + _EPS)
    y = y * gamma.reshape(1, -1, 1) + beta.reshape(1, -1, 1)
    y = y.reshape(B, C, W, K).transpose(0, 1, 3, 2)
    return Mixture(mix.positions, y)


if __name__ == "__main__":
    key = jax.random.PRNGKey(0)
    B, C, K, W, D = 2, 4, 16, 8, 3   # batch, channels, in_kernels, n_weights, n_dims
    k1, k2 = jax.random.split(key)

    positions = jax.random.normal(k1, (B, C, K, D), dtype=jnp.float32)
    weights = jax.random.normal(k2, (B, C, K, W), dtype=jnp.float32)
    mix = Mixture(positions, weights)

    F = C * W
    gamma = 1.0 + 0.01 * jnp.arange(F, dtype=jnp.float32)
    beta = 0.05 * jnp.arange(F, dtype=jnp.float32)

    ref = _reference_forward(mix, gamma, beta, C, W)

    # Fused single-pass path (default).
    out = kernel_norm_forward(mix, gamma, beta, C, W)
    jax.block_until_ready(out.weights)
    assert out.weights.shape == (B, C, K, W)
    assert jnp.allclose(out.weights, ref.weights, atol=1e-4, rtol=1e-4)
    assert jnp.array_equal(out.positions, positions)

    # Chunked two-pass fallback (accumulate-then-apply), exercised explicitly.
    out2 = kernel_norm_forward(mix, gamma, beta, C, W, force_chunked=True)
    jax.block_until_ready(out2.weights)
    assert jnp.allclose(out2.weights, ref.weights, atol=1e-4, rtol=1e-4)
    assert jnp.array_equal(out2.positions, positions)

    print("KERNEL_OK")
</pallas_src>

<mosaic_0001>
module attributes {stable_mosaic.version = 11 : i64} {
  func.func @_fused_norm_kernel(%arg0: i32, %arg1: memref<2x4x128xf32, #tpu.memory_space<vmem>>, %arg2: memref<4x128xf32, #tpu.memory_space<vmem>>, %arg3: memref<4x128xf32, #tpu.memory_space<vmem>>, %arg4: memref<2x4x128xf32, #tpu.memory_space<vmem>>) attributes {dimension_semantics = [#tpu.dimension_semantics<parallel>], iteration_bounds = array<i64: 1>, scalar_prefetch = 0 : i64, scratch_operands = 0 : i64, tpu.core_type = #tpu.core_type<tc>, window_params = [{transform_indices = @transform_0, window_bounds = array<i64: 2, 4, 128>}, {transform_indices = @transform_1, window_bounds = array<i64: 4, 128>}, {transform_indices = @transform_2, window_bounds = array<i64: 4, 128>}, {transform_indices = @transform_3, window_bounds = array<i64: 2, 4, 128>}]} {
    %c0 = arith.constant 0 : index
    %c0_0 = arith.constant 0 : index
    %c0_1 = arith.constant 0 : index
    %0 = vector.load %arg1[%c0, %c0_0, %c0_1] : memref<2x4x128xf32, #tpu.memory_space<vmem>>, vector<2x4x128xf32>
    %cst = arith.constant dense<0.000000e+00> : vector<4x128xf32>
    %1 = vector.multi_reduction <add>, %0, %cst [0] : vector<2x4x128xf32> to vector<4x128xf32>
    %2 = arith.mulf %0, %0 : vector<2x4x128xf32>
    %cst_2 = arith.constant dense<0.000000e+00> : vector<4x128xf32>
    %3 = vector.multi_reduction <add>, %2, %cst_2 [0] : vector<2x4x128xf32> to vector<4x128xf32>
    %4 = tpu.iota {dimensions = array<i32: 0>} : vector<128x128xi32>
    %c8_i32 = arith.constant 8 : i32
    %c0_i32 = arith.constant 0 : i32
    %5 = arith.cmpi eq, %c8_i32, %c0_i32 : i32
    %c1_i32 = arith.constant 1 : i32
    %6 = arith.select %5, %c1_i32, %c8_i32 : i32
    %7 = vector.broadcast %6 : i32 to vector<128x128xi32>
    %8 = arith.remsi %4, %7 : vector<128x128xi32>
    %c0_i32_3 = arith.constant 0 : i32
    %9 = vector.broadcast %c0_i32_3 : i32 to vector<128x128xi32>
    %10 = arith.cmpi ne, %8, %9 : vector<128x128xi32>
    %c0_i32_4 = arith.constant 0 : i32
    %11 = vector.broadcast %c0_i32_4 : i32 to vector<128x128xi32>
    %12 = arith.cmpi slt, %8, %11 : vector<128x128xi32>
    %c0_i32_5 = arith.constant 0 : i32
    %13 = arith.cmpi slt, %6, %c0_i32_5 : i32
    %14 = vector.broadcast %13 : i1 to vector<128x128xi1>
    %15 = vector.broadcast %14 : vector<128x128xi1> to vector<128x128xi1>
    %16 = arith.xori %12, %15 : vector<128x128xi1>
    %17 = arith.andi %16, %10 : vector<128x128xi1>
    %18 = vector.broadcast %6 : i32 to vector<128x128xi32>
    %19 = arith.addi %8, %18 : vector<128x128xi32>
    %20 = arith.select %17, %19, %8 : vector<128x128xi1>, vector<128x128xi32>
    %21 = tpu.iota {dimensions = array<i32: 1>} : vector<128x128xi32>
    %c8_i32_6 = arith.constant 8 : i32
    %c0_i32_7 = arith.constant 0 : i32
    %22 = arith.cmpi eq, %c8_i32_6, %c0_i32_7 : i32
    %c1_i32_8 = arith.constant 1 : i32
    %23 = arith.select %22, %c1_i32_8, %c8_i32_6 : i32
    %24 = vector.broadcast %23 : i32 to vector<128x128xi32>
    %25 = arith.remsi %21, %24 : vector<128x128xi32>
    %c0_i32_9 = arith.constant 0 : i32
    %26 = vector.broadcast %c0_i32_9 : i32 to vector<128x128xi32>
    %27 = arith.cmpi ne, %25, %26 : vector<128x128xi32>
    %c0_i32_10 = arith.constant 0 : i32
    %28 = vector.broadcast %c0_i32_10 : i32 to vector<128x128xi32>
    %29 = arith.cmpi slt, %25, %28 : vector<128x128xi32>
    %c0_i32_11 = arith.constant 0 : i32
    %30 = arith.cmpi slt, %23, %c0_i32_11 : i32
    %31 = vector.broadcast %30 : i1 to vector<128x128xi1>
    %32 = vector.broadcast %31 : vector<128x128xi1> to vector<128x128xi1>
    %33 = arith.xori %29, %32 : vector<128x128xi1>
    %34 = arith.andi %33, %27 : vector<128x128xi1>
    %35 = vector.broadcast %23 : i32 to vector<128x128xi32>
    %36 = arith.addi %25, %35 : vector<128x128xi32>
    %37 = arith.select %34, %36, %25 : vector<128x128xi1>, vector<128x128xi32>
    %38 = arith.cmpi eq, %20, %37 : vector<128x128xi32>
    %39 = arith.extui %38 : vector<128x128xi1> to vector<128x128xi32>
    %40 = arith.sitofp %39 : vector<128x128xi32> to vector<128x128xf32>
    %cst_12 = arith.constant dense<0.000000e+00> : vector<4x128xf32>
    %41 = tpu.matmul %1, %40, %cst_12 {dimension_numbers = #tpu.dot_dimension_numbers<[1], [0], [0], [1], [0, 0, 1, 1], [], []>} : vector<4x128xf32>, vector<128x128xf32>, vector<4x128xf32> -> vector<4x128xf32>
    %cst_13 = arith.constant 3.125000e-02 : f32
    %42 = vector.broadcast %cst_13 : f32 to vector<4x128xf32>
    %43 = arith.mulf %41, %42 : vector<4x128xf32>
    %cst_14 = arith.constant dense<0.000000e+00> : vector<4x128xf32>
    %44 = tpu.matmul %3, %40, %cst_14 {dimension_numbers = #tpu.dot_dimension_numbers<[1], [0], [0], [1], [0, 0, 1, 1], [], []>} : vector<4x128xf32>, vector<128x128xf32>, vector<4x128xf32> -> vector<4x128xf32>
    %cst_15 = arith.constant 3.125000e-02 : f32
    %45 = vector.broadcast %cst_15 : f32 to vector<4x128xf32>
    %46 = arith.mulf %44, %45 : vector<4x128xf32>
    %47 = arith.mulf %43, %43 : vector<4x128xf32>
    %48 = arith.subf %46, %47 : vector<4x128xf32>
    %cst_16 = arith.constant 0.000000e+00 : f32
    %49 = vector.broadcast %cst_16 : f32 to vector<4x128xf32>
    %50 = arith.maximumf %48, %49 : vector<4x128xf32>
    %cst_17 = arith.constant 9.99999974E-6 : f32
    %51 = vector.broadcast %cst_17 : f32 to vector<4x128xf32>
    %52 = arith.addf %50, %51 : vector<4x128xf32>
    %53 = math.rsqrt %52 : vector<4x128xf32>
    %c0_18 = arith.constant 0 : index
    %c0_19 = arith.constant 0 : index
    %54 = vector.load %arg2[%c0_18, %c0_19] : memref<4x128xf32, #tpu.memory_space<vmem>>, vector<4x128xf32>
    %55 = arith.mulf %54, %53 : vector<4x128xf32>
    %c0_20 = arith.constant 0 : index
    %c0_21 = arith.constant 0 : index
    %56 = vector.load %arg3[%c0_20, %c0_21] : memref<4x128xf32, #tpu.memory_space<vmem>>, vector<4x128xf32>
    %57 = arith.mulf %43, %55 : vector<4x128xf32>
    %58 = arith.subf %56, %57 : vector<4x128xf32>
    %59 = vector.shape_cast %55 : vector<4x128xf32> to vector<1x4x128xf32>
    %60 = vector.broadcast %59 : vector<1x4x128xf32> to vector<2x4x128xf32>
    %61 = arith.mulf %0, %60 : vector<2x4x128xf32>
    %62 = vector.shape_cast %58 : vector<4x128xf32> to vector<1x4x128xf32>
    %63 = vector.broadcast %62 : vector<1x4x128xf32> to vector<2x4x128xf32>
    %64 = arith.addf %61, %63 : vector<2x4x128xf32>
    %c0_22 = arith.constant 0 : index
    %c0_23 = arith.constant 0 : index
    %c0_24 = arith.constant 0 : index
    %65 = vector.load %arg4[%c0_22, %c0_23, %c0_24] : memref<2x4x128xf32, #tpu.memory_space<vmem>>, vector<2x4x128xf32>
    tpu.vector_store %arg4[%c0_22, %c0_23, %c0_24], %64 {strides = array<i32>} : memref<2x4x128xf32, #tpu.memory_space<vmem>>, vector<2x4x128xf32>,
    return
  }
  func.func @transform_0(%arg0: i32) -> (i32, i32, i32) {
    %c0_i32 = arith.constant 0 : i32
    %c0_i32_0 = arith.constant 0 : i32
    %c0_i32_1 = arith.constant 0 : i32
    return %c0_i32, %arg0, %c0_i32_0 : i32, i32, i32
  }
  func.func @transform_1(%arg0: i32) -> (i32, i32) {
    %c0_i32 = arith.constant 0 : i32
    %c0_i32_0 = arith.constant 0 : i32
    return %arg0, %c0_i32 : i32, i32
  }
  func.func @transform_2(%arg0: i32) -> (i32, i32) {
    %c0_i32 = arith.constant 0 : i32
    %c0_i32_0 = arith.constant 0 : i32
    return %arg0, %c0_i32 : i32, i32
  }
  func.func @transform_3(%arg0: i32) -> (i32, i32, i32) {
    %c0_i32 = arith.constant 0 : i32
    %c0_i32_0 = arith.constant 0 : i32
    %c0_i32_1 = arith.constant 0 : i32
    return %c0_i32, %arg0, %c0_i32_0 : i32, i32, i32
  }
}

</mosaic_0001>

<llo_original>
// kernel: tpu_custom_call.1
$region0: #{tpu_custom_call.1}
  #allocation0 [shape = 'u32[]', space=smem, size = 0x4, offset = 0x4, fixed_abs, tag = 'smem constant byte address 0x4 - core index']
  #allocation1 [shape = 'u32[144,128]{1,0:T(1,128)}', space=vmem, size = 0x12000, scoped, tag = 'internal scratch']
  %s0 = inlined_call_operand.hbm [shape: f32[2,4,128], index: 0, kind: input, shape index: {}]
  %s1 = inlined_call_operand.hbm [shape: f32[4,128], index: 1, kind: input, shape index: {}]
  %s2 = inlined_call_operand.vmem [shape: f32[4,128], index: 2, kind: input, shape index: {}]
  %s3 = inlined_call_operand.hbm [shape: f32[2,4,128], index: 3, kind: output, shape index: {}]
  %s4 = sld [smem:[#allocation0]]
  $region30: #{tpu_custom_call.1} parent=0
    _
  %s6 = ssub.s32 1, %s4
  %s7 = scalar_select 0, %s6, %s4
  $region1: #{tpu_custom_call.1} parent=0
    #allocation2 [shape = 'u8[4096]{0}', space=vmem, size = 0x1000, scoped, tag = 'input window, operand 0, single buffered']
    #allocation3 [shape = 's32[1]{0}', space=sflag, size = 0x4, scoped, tag = 'scoped memory for tpu_custom_call.1']
    #allocation4 [shape = 's32[1]{0}', space=sflag, size = 0x4, scoped, tag = 'scoped memory for tpu_custom_call.1']
    #allocation5 [shape = 'u8[2048]{0}', space=vmem, size = 0x800, scoped, tag = 'input window, operand 1, single buffered']
    #allocation6 [shape = 's32[1]{0}', space=sflag, size = 0x4, scoped, tag = 'scoped memory for tpu_custom_call.1']
    #allocation7 [shape = 'u8[4096]{0}', space=vmem, size = 0x1000, scoped, tag = 'output window, operand 0, single buffered']
    %8 = vsyncpa [#allocation3], 0
    %9 = vsyncpa [#allocation6], 0
    %10 = vsyncpa [#allocation4], 0
    // Predicated region
    $region2: #{tpu_custom_call.1} parent=1 // pred_check
      _
    $region3: #{tpu_custom_call.1} parent=1 // pred_check_branch
      %12 = sbr.rel (0) target = $region5
    $region4: #{tpu_custom_call.1} parent=1 // pred_region
      %s14 = ssub.s32 128, 128
      %15 = vsyncadd [#allocation3], %s14
      %s16 = sshll.u32 [#allocation2], 4
      %s17 = int_to_ptr.vmem [resolvable:$true] %s16
      %22 = dma.hbm_to_vmem [thread:$0]  %s0, 128, %s17, [#allocation3], 64, 64, 4
    $region5: #{tpu_custom_call.1} parent=1 // pred_fallthru
      _
    // Predicated region
    $region6: #{tpu_custom_call.1} parent=1 // pred_check
      _
    $region7: #{tpu_custom_call.1} parent=1 // pred_check_branch
      %24 = sbr.rel (0) target = $region9
    $region8: #{tpu_custom_call.1} parent=1 // pred_region
      %s26 = ssub.s32 64, 64
      %27 = vsyncadd [#allocation6], %s26
      %s29 = sshll.u32 [#allocation5], 4
      %s30 = int_to_ptr.vmem [resolvable:$true] %s29
      %32 = dma.hbm_to_vmem [thread:$0]  %s1, 64, %s30, [#allocation6]
    $region9: #{tpu_custom_call.1} parent=1 // pred_fallthru
      _
    // Predicated region
    $region10: #{tpu_custom_call.1} parent=1 // pred_check
      _
    $region11: #{tpu_custom_call.1} parent=1 // pred_check_branch
      %34 = sbr.rel (0) target = $region13
    $region12: #{tpu_custom_call.1} parent=1 // pred_region
      _
    $region13: #{tpu_custom_call.1} parent=1 // pred_fallthru
      _
    // Predicated region
    $region14: #{tpu_custom_call.1} parent=1 // pred_check
      _
    $region15: #{tpu_custom_call.1} parent=1 // pred_check_branch
      %36 = sbr.rel (0) target = $region17
    $region16: #{tpu_custom_call.1} parent=1 // pred_region
      %37 = dma.done [#allocation3], 128
    $region17: #{tpu_custom_call.1} parent=1 // pred_fallthru
      _
    // Predicated region
    $region18: #{tpu_custom_call.1} parent=1 // pred_check
      _
    $region19: #{tpu_custom_call.1} parent=1 // pred_check_branch
      %39 = sbr.rel (0) target = $region21
    $region20: #{tpu_custom_call.1} parent=1 // pred_region
      %40 = dma.done [#allocation6], 64
    $region21: #{tpu_custom_call.1} parent=1 // pred_fallthru
      _
    %v41 = vld [vmem:[#allocation2] sm:$0xf]
    %v42 = vld [vmem:[#allocation2 + $0x4] sm:$0xf]
    %vm43 = vcmask 1043456
    %v44 = vsel %vm43, %v41, 0.0
    %v45 = vsel %vm43, %v42, 0.0
    %v46 = vadd.f32 %v44, %v45
    %v47 = vmul.f32 %v41, %v41
    %v48 = vmul.f32 %v42, %v42
    %v49 = vsel %vm43, %v47, 0.0
    %v50 = vsel %vm43, %v48, 0.0
    %v51 = vadd.f32 %v49, %v50
    %v52 = vlaneseq
    %v53 = vshrl.u32 %v52, 7
    %v54 = vadd.s32 %v53, 8
    %v55 = vadd.s32 %v53, 16
    %v56 = vadd.s32 %v53, 24
    %v57 = vadd.s32 %v53, 32
    %v58 = vadd.s32 %v53, 40
    %v59 = vadd.s32 %v53, 48
    %v60 = vadd.s32 %v53, 56
    %v61 = vadd.s32 %v53, 64
    %v62 = vadd.s32 %v53, 72
    %v63 = vadd.s32 %v53, 80
    %v64 = vadd.s32 %v53, 88
    %v65 = vadd.s32 %v53, 96
    %v66 = vadd.s32 %v53, 104
    %v67 = vadd.s32 %v53, 112
    %v68 = vadd.s32 %v53, 120
    %vm69 = vcmp.lt.s32.totalorder %v53, 0
    %v70 = vsub.s32 0, %v53
    %v71 = vsel %vm69, %v70, %v53
    %v72 = vshrl.u32 %v71, 3
    %v73 = vand.u32 %v71, 7
    %v74 = vsub.s32 0, %v73
    %v75 = vsel %vm69, %v74, %v73
    %vm76 = vcmp.lt.s32.totalorder %v54, 0
    %v77 = vsub.s32 0, %v54
    %v78 = vsel %vm76, %v77, %v54
    %v79 = vshrl.u32 %v78, 3
    %v80 = vand.u32 %v78, 7
    %v81 = vsub.s32 0, %v80
    %v82 = vsel %vm76, %v81, %v80
    %vm83 = vcmp.lt.s32.totalorder %v55, 0
    %v84 = vsub.s32 0, %v55
    %v85 = vsel %vm83, %v84, %v55
    %v86 = vshrl.u32 %v85, 3
    %v87 = vand.u32 %v85, 7
    %v88 = vsub.s32 0, %v87
    %v89 = vsel %vm83, %v88, %v87
    %vm90 = vcmp.lt.s32.totalorder %v56, 0
    %v91 = vsub.s32 0, %v56
    %v92 = vsel %vm90, %v91, %v56
    %v93 = vshrl.u32 %v92, 3
    %v94 = vand.u32 %v92, 7
    %v95 = vsub.s32 0, %v94
    %v96 = vsel %vm90, %v95, %v94
    %vm97 = vcmp.lt.s32.totalorder %v57, 0
    %v98 = vsub.s32 0, %v57
    %v99 = vsel %vm97, %v98, %v57
    %v100 = vshrl.u32 %v99, 3
    %v101 = vand.u32 %v99, 7
    %v102 = vsub.s32 0, %v101
    %v103 = vsel %vm97, %v102, %v101
    %vm104 = vcmp.lt.s32.totalorder %v58, 0
    %v105 = vsub.s32 0, %v58
    %v106 = vsel %vm104, %v105, %v58
    %v107 = vshrl.u32 %v106, 3
    %v108 = vand.u32 %v106, 7
    %v109 = vsub.s32 0, %v108
    %v110 = vsel %vm104, %v109, %v108
    %vm111 = vcmp.lt.s32.totalorder %v59, 0
    %v112 = vsub.s32 0, %v59
    %v113 = vsel %vm111, %v112, %v59
    %v114 = vshrl.u32 %v113, 3
    %v115 = vand.u32 %v113, 7
    %v116 = vsub.s32 0, %v115
    %v117 = vsel %vm111, %v116, %v115
    %vm118 = vcmp.lt.s32.totalorder %v60, 0
    %v119 = vsub.s32 0, %v60
    %v120 = vsel %vm118, %v119, %v60
    %v121 = vshrl.u32 %v120, 3
    %v122 = vand.u32 %v120, 7
    %v123 = vsub.s32 0, %v122
    %v124 = vsel %vm118, %v123, %v122
    %vm125 = vcmp.lt.s32.totalorder %v61, 0
    %v126 = vsub.s32 0, %v61
    %v127 = vsel %vm125, %v126, %v61
    %v128 = vshrl.u32 %v127, 3
    %v129 = vand.u32 %v127, 7
    %v130 = vsub.s32 0, %v129
    %v131 = vsel %vm125, %v130, %v129
    %vm132 = vcmp.lt.s32.totalorder %v62, 0
    %v133 = vsub.s32 0, %v62
    %v134 = vsel %vm132, %v133, %v62
    %v135 = vshrl.u32 %v134, 3
    %v136 = vand.u32 %v134, 7
    %v137 = vsub.s32 0, %v136
    %v138 = vsel %vm132, %v137, %v136
    %vm139 = vcmp.lt.s32.totalorder %v63, 0
    %v140 = vsub.s32 0, %v63
    %v141 = vsel %vm139, %v140, %v63
    %v142 = vshrl.u32 %v141, 3
    %v143 = vand.u32 %v141, 7
    %v144 = vsub.s32 0, %v143
    %v145 = vsel %vm139, %v144, %v143
    %vm146 = vcmp.lt.s32.totalorder %v64, 0
    %v147 = vsub.s32 0, %v64
    %v148 = vsel %vm146, %v147, %v64
    %v149 = vshrl.u32 %v148, 3
    %v150 = vand.u32 %v148, 7
    %v151 = vsub.s32 0, %v150
    %v152 = vsel %vm146, %v151, %v150
    %vm153 = vcmp.lt.s32.totalorder %v65, 0
    %v154 = vsub.s32 0, %v65
    %v155 = vsel %vm153, %v154, %v65
    %v156 = vshrl.u32 %v155, 3
    %v157 = vand.u32 %v155, 7
    %v158 = vsub.s32 0, %v157
    %v159 = vsel %vm153, %v158, %v157
    %vm160 = vcmp.lt.s32.totalorder %v66, 0
    %v161 = vsub.s32 0, %v66
    %v162 = vsel %vm160, %v161, %v66
    %v163 = vshrl.u32 %v162, 3
    %v164 = vand.u32 %v162, 7
    %v165 = vsub.s32 0, %v164
    %v166 = vsel %vm160, %v165, %v164
    %vm167 = vcmp.lt.s32.totalorder %v67, 0
    %v168 = vsub.s32 0, %v67
    %v169 = vsel %vm167, %v168, %v67
    %v170 = vshrl.u32 %v169, 3
    %v171 = vand.u32 %v169, 7
    %v172 = vsub.s32 0, %v171
    %v173 = vsel %vm167, %v172, %v171
    %vm174 = vcmp.lt.s32.totalorder %v68, 0
    %v175 = vsub.s32 0, %v68
    %v176 = vsel %vm174, %v175, %v68
    %v177 = vshrl.u32 %v176, 3
    %v178 = vand.u32 %v176, 7
    %v179 = vsub.s32 0, %v178
    %v180 = vsel %vm174, %v179, %v178
    %vm181 = vcmp.ne.s32.totalorder %v75, 0
    %vm182 = vcmp.ne.s32.totalorder %v82, 0
    %vm183 = vcmp.ne.s32.totalorder %v89, 0
    %vm184 = vcmp.ne.s32.totalorder %v96, 0
    %vm185 = vcmp.ne.s32.totalorder %v103, 0
    %vm186 = vcmp.ne.s32.totalorder %v110, 0
    %vm187 = vcmp.ne.s32.totalorder %v117, 0
    %vm188 = vcmp.ne.s32.totalorder %v124, 0
    %vm189 = vcmp.ne.s32.totalorder %v131, 0
    %vm190 = vcmp.ne.s32.totalorder %v138, 0
    %vm191 = vcmp.ne.s32.totalorder %v145, 0
    %vm192 = vcmp.ne.s32.totalorder %v152, 0
    %vm193 = vcmp.ne.s32.totalorder %v159, 0
    %vm194 = vcmp.ne.s32.totalorder %v166, 0
    %vm195 = vcmp.ne.s32.totalorder %v173, 0
    %vm196 = vcmp.ne.s32.totalorder %v180, 0
    %vm197 = vcmp.lt.s32.totalorder %v75, 0
    %vm198 = vcmp.lt.s32.totalorder %v82, 0
    %vm199 = vcmp.lt.s32.totalorder %v89, 0
    %vm200 = vcmp.lt.s32.totalorder %v96, 0
    %vm201 = vcmp.lt.s32.totalorder %v103, 0
    %vm202 = vcmp.lt.s32.totalorder %v110, 0
    %vm203 = vcmp.lt.s32.totalorder %v117, 0
    %vm204 = vcmp.lt.s32.totalorder %v124, 0
    %vm205 = vcmp.lt.s32.totalorder %v131, 0
    %vm206 = vcmp.lt.s32.totalorder %v138, 0
    %vm207 = vcmp.lt.s32.totalorder %v145, 0
    %vm208 = vcmp.lt.s32.totalorder %v152, 0
    %vm209 = vcmp.lt.s32.totalorder %v159, 0
    %vm210 = vcmp.lt.s32.totalorder %v166, 0
    %vm211 = vcmp.lt.s32.totalorder %v173, 0
    %vm212 = vcmp.lt.s32.totalorder %v180, 0
    %vm213 = vmand %vm197, %vm181
    %vm214 = vmand %vm198, %vm182
    %vm215 = vmand %vm199, %vm183
    %vm216 = vmand %vm200, %vm184
    %vm217 = vmand %vm201, %vm185
    %vm218 = vmand %vm202, %vm186
    %vm219 = vmand %vm203, %vm187
    %vm220 = vmand %vm204, %vm188
    %vm221 = vmand %vm205, %vm189
    %vm222 = vmand %vm206, %vm190
    %vm223 = vmand %vm207, %vm191
    %vm224 = vmand %vm208, %vm192
    %vm225 = vmand %vm209, %vm193
    %vm226 = vmand %vm210, %vm194
    %vm227 = vmand %vm211, %vm195
    %vm228 = vmand %vm212, %vm196
    %v229 = vadd.s32 %v75, 8
    %v230 = vadd.s32 %v82, 8
    %v231 = vadd.s32 %v89, 8
    %v232 = vadd.s32 %v96, 8
    %v233 = vadd.s32 %v103, 8
    %v234 = vadd.s32 %v110, 8
    %v235 = vadd.s32 %v117, 8
    %v236 = vadd.s32 %v124, 8
    %v237 = vadd.s32 %v131, 8
    %v238 = vadd.s32 %v138, 8
    %v239 = vadd.s32 %v145, 8
    %v240 = vadd.s32 %v152, 8
    %v241 = vadd.s32 %v159, 8
    %v242 = vadd.s32 %v166, 8
    %v243 = vadd.s32 %v173, 8
    %v244 = vadd.s32 %v180, 8
    %v245 = vsel %vm213, %v229, %v75
    %v246 = vsel %vm214, %v230, %v82
    %v247 = vsel %vm215, %v231, %v89
    %v248 = vsel %vm216, %v232, %v96
    %v249 = vsel %vm217, %v233, %v103
    %v250 = vsel %vm218, %v234, %v110
    %v251 = vsel %vm219, %v235, %v117
    %v252 = vsel %vm220, %v236, %v124
    %v253 = vsel %vm221, %v237, %v131
    %v254 = vsel %vm222, %v238, %v138
    %v255 = vsel %vm223, %v239, %v145
    %v256 = vsel %vm224, %v240, %v152
    %v257 = vsel %vm225, %v241, %v159
    %v258 = vsel %vm226, %v242, %v166
    %v259 = vsel %vm227, %v243, %v173
    %v260 = vsel %vm228, %v244, %v180
    %v261 = vlaneseq
    %v262 = vand.u32 %v261, 127
    %vm263 = vcmp.lt.s32.totalorder %v262, 0
    %v264 = vsub.s32 0, %v262
    %v265 = vsel %vm263, %v264, %v262
    %v266 = vshrl.u32 %v265, 3
    %v267 = vand.u32 %v265, 7
    %v268 = vsub.s32 0, %v267
    %v269 = vsel %vm263, %v268, %v267
    %vm270 = vcmp.ne.s32.totalorder %v269, 0
    %vm271 = vcmp.lt.s32.totalorder %v269, 0
    %vm272 = vmand %vm271, %vm270
    %v273 = vadd.s32 %v269, 8
    %v274 = vsel %vm272, %v273, %v269
    %vm275 = vcmp.eq.s32.totalorder %v245, %v274
    %vm276 = vcmp.eq.s32.totalorder %v246, %v274
    %vm277 = vcmp.eq.s32.totalorder %v247, %v274
    %vm278 = vcmp.eq.s32.totalorder %v248, %v274
    %vm279 = vcmp.eq.s32.totalorder %v249, %v274
    %vm280 = vcmp.eq.s32.totalorder %v250, %v274
    %vm281 = vcmp.eq.s32.totalorder %v251, %v274
    %vm282 = vcmp.eq.s32.totalorder %v252, %v274
    %vm283 = vcmp.eq.s32.totalorder %v253, %v274
    %vm284 = vcmp.eq.s32.totalorder %v254, %v274
    %vm285 = vcmp.eq.s32.totalorder %v255, %v274
    %vm286 = vcmp.eq.s32.totalorder %v256, %v274
    %vm287 = vcmp.eq.s32.totalorder %v257, %v274
    %vm288 = vcmp.eq.s32.totalorder %v258, %v274
    %vm289 = vcmp.eq.s32.totalorder %v259, %v274
    %vm290 = vcmp.eq.s32.totalorder %v260, %v274
    %v291 = vsel %vm275, 1, 0
    %v292 = vsel %vm276, 1, 0
    %v293 = vsel %vm277, 1, 0
    %v294 = vsel %vm278, 1, 0
    %v295 = vsel %vm279, 1, 0
    %v296 = vsel %vm280, 1, 0
    %v297 = vsel %vm281, 1, 0
    %v298 = vsel %vm282, 1, 0
    %v299 = vsel %vm283, 1, 0
    %v300 = vsel %vm284, 1, 0
    %v301 = vsel %vm285, 1, 0
    %v302 = vsel %vm286, 1, 0
    %v303 = vsel %vm287, 1, 0
    %v304 = vsel %vm288, 1, 0
    %v305 = vsel %vm289, 1, 0
    %v306 = vsel %vm290, 1, 0
    %v307 = vcvt.s32.f32 %v291
    %v308 = vcvt.s32.f32 %v292
    %v309 = vcvt.s32.f32 %v293
    %v310 = vcvt.s32.f32 %v294
    %v311 = vcvt.s32.f32 %v295
    %v312 = vcvt.s32.f32 %v296
    %v313 = vcvt.s32.f32 %v297
    %v314 = vcvt.s32.f32 %v298
    %v315 = vcvt.s32.f32 %v299
    %v316 = vcvt.s32.f32 %v300
    %v317 = vcvt.s32.f32 %v301
    %v318 = vcvt.s32.f32 %v302
    %v319 = vcvt.s32.f32 %v303
    %v320 = vcvt.s32.f32 %v304
    %v321 = vcvt.s32.f32 %v305
    %v322 = vcvt.s32.f32 %v306
    %323 = vmatprep.subr.mxu0 0.0
    %324 = vmatpush1.msra.mxu0 %v307
    %325 = vmatprep.subr.mxu0 0.0
    %326 = vmatpush1.msra.mxu0 %v308
    %327 = vmatprep.subr.mxu0 0.0
    %328 = vmatpush1.msra.mxu0 %v309
    %329 = vmatprep.subr.mxu0 0.0
    %330 = vmatpush1.msra.mxu0 %v310
    %331 = vmatprep.subr.mxu0 0.0
    %332 = vmatpush1.msra.mxu0 %v311
    %333 = vmatprep.subr.mxu0 0.0
    %334 = vmatpush1.msra.mxu0 %v312
    %335 = vmatprep.subr.mxu0 0.0
    %336 = vmatpush1.msra.mxu0 %v313
    %337 = vmatprep.subr.mxu0 0.0
    %338 = vmatpush1.msra.mxu0 %v314
    %339 = vmatprep.subr.mxu0 0.0
    %340 = vmatpush1.msra.mxu0 %v315
    %341 = vmatprep.subr.mxu0 0.0
    %342 = vmatpush1.msra.mxu0 %v316
    %343 = vmatprep.subr.mxu0 0.0
    %344 = vmatpush1.msra.mxu0 %v317
    %345 = vmatprep.subr.mxu0 0.0
    %346 = vmatpush1.msra.mxu0 %v318
    %347 = vmatprep.subr.mxu0 0.0
    %348 = vmatpush1.msra.mxu0 %v319
    %349 = vmatprep.subr.mxu0 0.0
    %350 = vmatpush1.msra.mxu0 %v320
    %351 = vmatprep.subr.mxu0 0.0
    %352 = vmatpush1.msra.mxu0 %v321
    %353 = vmatprep.subr.mxu0 0.0
    %354 = vmatpush1.msra.mxu0 %v322
    %355 = vmatprep.subr.mxu0 0.0
    %356 = vmatpush1.msra.mxu0 0.0
    %357 = vmatprep.subr.mxu0 0.0
    %358 = vmatpush1.msra.mxu0 0.0
    %359 = vmatprep.subr.mxu0 0.0
    %360 = vmatpush1.msra.mxu0 0.0
    %361 = vmatprep.subr.mxu0 0.0
    %362 = vmatpush1.msra.mxu0 0.0
    %363 = vmatprep.subr.mxu0 0.0
    %364 = vmatpush1.msra.mxu0 0.0
    %365 = vmatprep.subr.mxu0 0.0
    %366 = vmatpush1.msra.mxu0 0.0
    %367 = vmatprep.subr.mxu0 0.0
    %368 = vmatpush1.msra.mxu0 0.0
    %369 = vmatprep.subr.mxu0 0.0
    %370 = vmatpush1.msra.mxu0 0.0
    %371 = vmatprep.subr.mxu0 0.0
    %372 = vmatpush1.msra.mxu0 0.0
    %373 = vmatprep.subr.mxu0 0.0
    %374 = vmatpush1.msra.mxu0 0.0
    %375 = vmatprep.subr.mxu0 0.0
    %376 = vmatpush1.msra.mxu0 0.0
    %377 = vmatprep.subr.mxu0 0.0
    %378 = vmatpush1.msra.mxu0 0.0
    %379 = vmatprep.subr.mxu0 0.0
    %380 = vmatpush1.msra.mxu0 0.0
    %381 = vmatprep.subr.mxu0 0.0
    %382 = vmatpush1.msra.mxu0 0.0
    %383 = vmatprep.subr.mxu0 0.0
    %384 = vmatpush1.msra.mxu0 0.0
    %385 = vmatprep.subr.mxu0 0.0
    %386 = vmatpush1.msra.mxu0 0.0
    %387 = vmatprep.mubr.f32.mxu0 0.0
    %388 = vmatmul.mubr.f32.gmra.mrb[0].mxu0 %v46
    %v389 = vpop.f32.mrb[0].mxu0
    %v390 = vadd.f32 0.0, %v389
    %v391 = vpop.f32.mrb[0].mxu0
    %392 = vdwg.mxu0
    %v393 = vmul.f32 %v390, 0.03125
    %394 = vmatprep.subr.mxu0 0.0
    %395 = vmatpush1.msra.mxu0 %v307
    %396 = vmatprep.subr.mxu0 0.0
    %397 = vmatpush1.msra.mxu0 %v308
    %398 = vmatprep.subr.mxu0 0.0
    %399 = vmatpush1.msra.mxu0 %v309
    %400 = vmatprep.subr.mxu0 0.0
    %401 = vmatpush1.msra.mxu0 %v310
    %402 = vmatprep.subr.mxu0 0.0
    %403 = vmatpush1.msra.mxu0 %v311
    %404 = vmatprep.subr.mxu0 0.0
    %405 = vmatpush1.msra.mxu0 %v312
    %406 = vmatprep.subr.mxu0 0.0
    %407 = vmatpush1.msra.mxu0 %v313
    %408 = vmatprep.subr.mxu0 0.0
    %409 = vmatpush1.msra.mxu0 %v314
    %410 = vmatprep.subr.mxu0 0.0
    %411 = vmatpush1.msra.mxu0 %v315
    %412 = vmatprep.subr.mxu0 0.0
    %413 = vmatpush1.msra.mxu0 %v316
    %414 = vmatprep.subr.mxu0 0.0
    %415 = vmatpush1.msra.mxu0 %v317
    %416 = vmatprep.subr.mxu0 0.0
    %417 = vmatpush1.msra.mxu0 %v318
    %418 = vmatprep.subr.mxu0 0.0
    %419 = vmatpush1.msra.mxu0 %v319
    %420 = vmatprep.subr.mxu0 0.0
    %421 = vmatpush1.msra.mxu0 %v320
    %422 = vmatprep.subr.mxu0 0.0
    %423 = vmatpush1.msra.mxu0 %v321
    %424 = vmatprep.subr.mxu0 0.0
    %425 = vmatpush1.msra.mxu0 %v322
    %426 = vmatprep.subr.mxu0 0.0
    %427 = vmatpush1.msra.mxu0 0.0
    %428 = vmatprep.subr.mxu0 0.0
    %429 = vmatpush1.msra.mxu0 0.0
    %430 = vmatprep.subr.mxu0 0.0
    %431 = vmatpush1.msra.mxu0 0.0
    %432 = vmatprep.subr.mxu0 0.0
    %433 = vmatpush1.msra.mxu0 0.0
    %434 = vmatprep.subr.mxu0 0.0
    %435 = vmatpush1.msra.mxu0 0.0
    %436 = vmatprep.subr.mxu0 0.0
    %437 = vmatpush1.msra.mxu0 0.0
    %438 = vmatprep.subr.mxu0 0.0
    %439 = vmatpush1.msra.mxu0 0.0
    %440 = vmatprep.subr.mxu0 0.0
    %441 = vmatpush1.msra.mxu0 0.0
    %442 = vmatprep.subr.mxu0 0.0
    %443 = vmatpush1.msra.mxu0 0.0
    %444 = vmatprep.subr.mxu0 0.0
    %445 = vmatpush1.msra.mxu0 0.0
    %446 = vmatprep.subr.mxu0 0.0
    %447 = vmatpush1.msra.mxu0 0.0
    %448 = vmatprep.subr.mxu0 0.0
    %449 = vmatpush1.msra.mxu0 0.0
    %450 = vmatprep.subr.mxu0 0.0
    %451 = vmatpush1.msra.mxu0 0.0
    %452 = vmatprep.subr.mxu0 0.0
    %453 = vmatpush1.msra.mxu0 0.0
    %454 = vmatprep.subr.mxu0 0.0
    %455 = vmatpush1.msra.mxu0 0.0
    %456 = vmatprep.subr.mxu0 0.0
    %457 = vmatpush1.msra.mxu0 0.0
    %458 = vmatprep.mubr.f32.mxu0 0.0
    %459 = vmatmul.mubr.f32.gmra.mrb[0].mxu0 %v51
    %v460 = vpop.f32.mrb[0].mxu0
    %v461 = vadd.f32 0.0, %v460
    %v462 = vpop.f32.mrb[0].mxu0
    %463 = vdwg.mxu0
    %v464 = vmul.f32 %v461, 0.03125
    %v465 = vmul.f32 %v393, %v393
    %v466 = vsub.f32 %v464, %v465
    %v467 = vmax.f32 %v466, 0.0
    %v468 = vadd.f32 %v467, 1e-05
    %v469 = vrsqrt.pop %v468
    %v470 = vld [vmem:[#allocation5] sm:$0xf]
    %v471 = vmul.f32 %v470, %v469
    %v472 = vld [vmem:[%s2] sm:$0xf]
    %v473 = vmul.f32 %v393, %v471
    %v474 = vsub.f32 %v472, %v473
    %v475 = vmul.f32 %v41, %v471
    %v476 = vmul.f32 %v42, %v471
    %v477 = vadd.f32 %v475, %v474
    %v478 = vadd.f32 %v476, %v474
    %479 = vst [vmem:[#allocation7] sm:$0xf] %v477
    %480 = vst [vmem:[#allocation7 + $0x4] sm:$0xf] %v478
    // Predicated region
    $region22: #{tpu_custom_call.1} parent=1 // pred_check
      _
    $region23: #{tpu_custom_call.1} parent=1 // pred_check_branch
      %482 = sbr.rel (0) target = $region25
    $region24: #{tpu_custom_call.1} parent=1 // pred_region
      %s484 = ssub.s32 128, 128
      %485 = vsyncadd [#allocation4], %s484
      %s486 = sshll.u32 [#allocation7], 4
      %s487 = int_to_ptr.vmem [resolvable:$true] %s486
      %492 = dma.vmem_to_hbm [thread:$0]  %s487, 128, %s3, [#allocation4], 64, 64, 4
    $region25: #{tpu_custom_call.1} parent=1 // pred_fallthru
      _
    // Predicated region
    $region26: #{tpu_custom_call.1} parent=1 // pred_check
      _
    $region27: #{tpu_custom_call.1} parent=1 // pred_check_branch
      %494 = sbr.rel (0) target = $region29
    $region28: #{tpu_custom_call.1} parent=1 // pred_region
      %495 = dma.done [#allocation4], 128
    $region29: #{tpu_custom_call.1} parent=1 // pred_fallthru
      _
    %496 = vsyncpa [#allocation3], 1
    %497 = vsyncpa [#allocation6], 1
    %498 = vsyncpa [#allocation4], 1

</llo_original>
